<compile_context>
chip_gen: v7x
topology: tpu7x:2x2x1
jax: 0.10.0
libtpu: 0.0.40
codegen_flags: <defaults>
</compile_context>

<pallas_src>
import functools
import math

import jax
import jax.numpy as jnp
from jax.experimental import pallas as pl
from jax.experimental.pallas import tpu as pltpu


def _round_up(v, m):
    return -(-v // m) * m


def _round_down(v, m):
    return (v // m) * m


def _sublane_multiple(dtype):
    bits = jnp.dtype(dtype).itemsize * 8
    if bits >= 32:
        return 8
    if bits == 16:
        return 16
    return 32


def _vmem_budget_bytes():
    """Usable VMEM budget, generation-aware (v5e/v6e: 128 MiB, v7x: 64 MiB)."""
    try:
        cap = pltpu.get_tpu_info().vmem_capacity_bytes
    except Exception:
        cap = 64 * 1024 * 1024  # conservative fallback (v7x-sized)
    return int(cap * 3 // 4)    # leave ~25% headroom for compiler scratch


# --------------------------- single-pass kernel ---------------------------- #

def _row_softmax_kernel(x_ref, o_ref):
    # Block shape: (R, F). Softmax over the lane (last) axis of each row.
    x = x_ref[...].astype(jnp.float32)
    m = jnp.max(x, axis=-1, keepdims=True)
    e = jnp.exp(x - m)
    s = jnp.sum(e, axis=-1, keepdims=True)
    # Exact reciprocal keeps strict 1e-6 parity with the PyTorch reference;
    # pl.reciprocal(s, approx=True) is ~free on the EUP if parity can relax.
    o_ref[...] = (e * pl.reciprocal(s)).astype(o_ref.dtype)


# ------------------- large-feat (chunked online) kernels ------------------- #

def _stats_kernel(feat, fc, x_ref, m_ref, l_ref):
    # Running max m and rescaled sum l per row, accumulated over feat chunks.
    j = pl.program_id(1)

    @pl.when(j == 0)
    def _():
        m_ref[...] = jnp.full_like(m_ref, -jnp.inf)
        l_ref[...] = jnp.zeros_like(l_ref)

    x = x_ref[...].astype(jnp.float32)
    col = jax.lax.broadcasted_iota(jnp.int32, x.shape, 1) + j * fc
    x = jnp.where(col < feat, x, -jnp.inf)  # mask ragged final feat chunk
    m_prev = m_ref[...]
    m_new = jnp.maximum(m_prev, jnp.max(x, axis=-1, keepdims=True))
    l_ref[...] = l_ref[...] * jnp.exp(m_prev - m_new) + jnp.sum(
        jnp.exp(x - m_new), axis=-1, keepdims=True)
    m_ref[...] = m_new


def _normalize_kernel(feat, fc, x_ref, m_ref, l_ref, o_ref):
    j = pl.program_id(1)
    x = x_ref[...].astype(jnp.float32)
    e = jnp.exp(x - m_ref[...])
    col = jax.lax.broadcasted_iota(jnp.int32, x.shape, 1) + j * fc
    e = jnp.where(col < feat, e, 0.0)
    o_ref[...] = (e * pl.reciprocal(l_ref[...])).astype(o_ref.dtype)


def _softmax_rows_chunked(x2, fc_request, budget):
    """Two-pass feat-chunked online softmax for rows whose feat axis does not
    fit a single VMEM block (large 3-D volumes; v7x's 64 MiB bites first)."""
    rows, feat = x2.shape
    itemsize = jnp.dtype(x2.dtype).itemsize
    sub = _sublane_multiple(x2.dtype)
    per_elem = 4 * itemsize + 8          # in/out double buffers + f32 temps
    r = rows if rows < sub else sub
    fc = max(128, _round_down(
        min(int(fc_request), _round_up(feat, 128), budget // max(r, 1) // per_elem),
        128))
    grid = (pl.cdiv(rows, r), pl.cdiv(feat, fc))
    x_spec = pl.BlockSpec((r, fc), lambda i, j: (i, j))
    stat_spec = pl.BlockSpec((r, 1), lambda i, j: (i, 0))
    n = rows * feat
    vmem_limit = min(budget, max(32 << 20, r * fc * per_elem + (8 << 20)))

    m, l = pl.pallas_call(
        functools.partial(_stats_kernel, feat, fc),
        out_shape=(jax.ShapeDtypeStruct((rows, 1), jnp.float32),
                   jax.ShapeDtypeStruct((rows, 1), jnp.float32)),
        grid_spec=pl.GridSpec(grid=grid, in_specs=[x_spec],
                              out_specs=(stat_spec, stat_spec)),
        compiler_params=pltpu.CompilerParams(
            dimension_semantics=("parallel", "arbitrary"),
            vmem_limit_bytes=vmem_limit),
        cost_estimate=pl.CostEstimate(flops=4 * n, transcendentals=n,
                                      bytes_accessed=x2.nbytes),
    )(x2)

    out2 = pl.pallas_call(
        functools.partial(_normalize_kernel, feat, fc),
        out_shape=jax.ShapeDtypeStruct((rows, feat), x2.dtype),
        grid_spec=pl.GridSpec(grid=grid,
                              in_specs=[x_spec, stat_spec, stat_spec],
                              out_specs=x_spec),
        compiler_params=pltpu.CompilerParams(
            dimension_semantics=("parallel", "parallel"),
            vmem_limit_bytes=vmem_limit),
        cost_estimate=pl.CostEstimate(flops=3 * n, transcendentals=n,
                                      bytes_accessed=2 * x2.nbytes),
    )(x2, m, l)
    return out2


# --------------------------------- wrapper --------------------------------- #

def softmax_nd(x, spatial_dims=2, *, target_block_bytes=None, force_feat_chunk=None):
    """Pallas implementation of SoftmaxND.forward.

    spatial_dims=2: softmax over the last two dims (NCHW -> over H, W).
    spatial_dims=3: softmax over the last three dims (NCDHW -> over D, H, W).
    """
    if spatial_dims == 2:
        n_spatial = 2
    elif spatial_dims == 3:
        n_spatial = 3
    else:
        raise ValueError("spatial_dims must be 2 or 3")
    if x.ndim < n_spatial:
        raise ValueError("input rank too small for spatial_dims")
    if not jnp.issubdtype(x.dtype, jnp.inexact):
        x = x.astype(jnp.float32)

    orig_shape = x.shape
    feat = math.prod(orig_shape[-n_spatial:])
    rows = math.prod(orig_shape[:-n_spatial])
    x2 = x.reshape(rows, feat)

    budget = _vmem_budget_bytes()
    if target_block_bytes is None:
        # ~4 MiB floor; up to 16 MiB on 128-MiB parts (v5e/v6e), ~6 MiB on v7x.
        target_block_bytes = max(4 << 20, min(16 << 20, budget // 8))

    itemsize = jnp.dtype(x.dtype).itemsize
    sub = _sublane_multiple(x.dtype)
    per_elem = 4 * itemsize + 8   # 2x in + 2x out double buffers + ~2 f32 temps

    # Large-feat fallback: even a single (sub, feat) block would not fit VMEM.
    if (force_feat_chunk is not None
            or min(rows, sub) * _round_up(feat, 128) * per_elem > budget):
        fc = (force_feat_chunk if force_feat_chunk is not None
              else target_block_bytes // (sub * itemsize))
        return _softmax_rows_chunked(x2, fc, budget).reshape(orig_shape)

    # Lane-dense feat: pad misaligned feat >= 128 with a large negative fill
    # (exp -> 0; softmax of the real columns is unchanged).
    feat_p = feat
    if feat % 128 != 0 and feat >= 128:
        feat_p = _round_up(feat, 128)
        fill = float(jnp.finfo(x.dtype).min)
        x2 = jnp.pad(x2, ((0, 0), (0, feat_p - feat)), constant_values=fill)
    # TODO(synk): tiny misaligned feat (<128) would prefer a transposed
    # (feat->sublanes, rows->lanes) layout; currently uses a full-dim masked block.

    per_row = feat_p * per_elem
    r_budget = _round_down(budget // per_row, sub)
    r_target = max(sub, _round_down(target_block_bytes // (feat_p * itemsize), sub))
    r = max(sub, min(r_budget, r_target, 2048))
    if rows > sub:
        # >= 2 balanced grid steps so the 'parallel' axis feeds both v7x cores.
        r = min(r, max(sub, _round_up(pl.cdiv(rows, 2), sub)))
    if r >= rows:
        r = rows   # single block covering all rows (block dim == full dim)
    grid = (pl.cdiv(rows, r),)

    spec = pl.BlockSpec((r, feat_p), lambda i: (i, 0))
    n = rows * feat_p
    vmem_limit = min(budget, max(32 << 20, r * per_row + (8 << 20)))

    out2 = pl.pallas_call(
        _row_softmax_kernel,
        out_shape=jax.ShapeDtypeStruct((rows, feat_p), x.dtype),
        grid_spec=pl.GridSpec(grid=grid, in_specs=[spec], out_specs=spec),
        compiler_params=pltpu.CompilerParams(
            dimension_semantics=("parallel",),
            vmem_limit_bytes=vmem_limit),
        cost_estimate=pl.CostEstimate(flops=5 * n, transcendentals=n,
                                      bytes_accessed=2 * n * itemsize),
    )(x2)

    if feat_p != feat:
        out2 = out2[:, :feat]
    return out2.reshape(orig_shape)


if __name__ == "__main__":
    def reference(x, n_spatial):
        axes = tuple(range(-n_spatial, 0))
        m = jnp.max(x, axis=axes, keepdims=True)
        e = jnp.exp(x - m)
        return e / jnp.sum(e, axis=axes, keepdims=True)

    key = jax.random.PRNGKey(0)
    k1, k2, k3 = jax.random.split(key, 3)

    # SoftmaxND(spatial_dims=2) on an NCHW input.
    x = jax.random.normal(k1, (2, 4, 16, 16), dtype=jnp.float32)
    out = jax.block_until_ready(softmax_nd(x, spatial_dims=2))
    assert out.shape == x.shape and out.dtype == x.dtype
    assert jnp.allclose(out, reference(x, 2), atol=1e-6, rtol=1e-6)

    # SoftmaxND(spatial_dims=3) on an NCDHW input.
    x3 = jax.random.normal(k2, (2, 3, 4, 8, 16), dtype=jnp.float32)
    out3 = jax.block_until_ready(softmax_nd(x3, spatial_dims=3))
    assert out3.shape == x3.shape and out3.dtype == x3.dtype
    assert jnp.allclose(out3, reference(x3, 3), atol=1e-6, rtol=1e-6)

    # Exercise the large-feat (chunked online-softmax) fallback, including the
    # in-kernel mask for the ragged final feature chunk, by forcing fc=128.
    xc = jax.random.normal(k3, (2, 4, 16, 15), dtype=jnp.float32)
    outc = jax.block_until_ready(softmax_nd(xc, spatial_dims=2, force_feat_chunk=128))
    assert outc.shape == xc.shape and outc.dtype == xc.dtype
    assert jnp.allclose(outc, reference(xc, 2), atol=1e-6, rtol=1e-6)

    print("KERNEL_OK")
</pallas_src>

<mosaic_0001>
module attributes {stable_mosaic.version = 11 : i64} {
  func.func @_row_softmax_kernel(%arg0: i32, %arg1: memref<8x256xf32, #tpu.memory_space<vmem>>, %arg2: memref<8x256xf32, #tpu.memory_space<vmem>>) attributes {dimension_semantics = [#tpu.dimension_semantics<parallel>], iteration_bounds = array<i64: 1>, scalar_prefetch = 0 : i64, scratch_operands = 0 : i64, tpu.core_type = #tpu.core_type<tc>, window_params = [{transform_indices = @transform_0, window_bounds = array<i64: 8, 256>}, {transform_indices = @transform_1, window_bounds = array<i64: 8, 256>}]} {
    %c0 = arith.constant 0 : index
    %c0_0 = arith.constant 0 : index
    %0 = vector.load %arg1[%c0, %c0_0] : memref<8x256xf32, #tpu.memory_space<vmem>>, vector<8x256xf32>
    %cst = arith.constant dense<0xFF800000> : vector<8xf32>
    %1 = vector.multi_reduction <maximumf>, %0, %cst [1] : vector<8x256xf32> to vector<8xf32>
    %2 = vector.shape_cast %1 : vector<8xf32> to vector<8x1xf32>
    %3 = vector.broadcast %2 : vector<8x1xf32> to vector<8x256xf32>
    %4 = arith.subf %0, %3 : vector<8x256xf32>
    %5 = math.exp %4 : vector<8x256xf32>
    %cst_1 = arith.constant dense<0.000000e+00> : vector<8xf32>
    %6 = vector.multi_reduction <add>, %5, %cst_1 [1] : vector<8x256xf32> to vector<8xf32>
    %7 = vector.shape_cast %6 : vector<8xf32> to vector<8x1xf32>
    %8 = tpu.reciprocal %7 : vector<8x1xf32> -> vector<8x1xf32>
    %9 = vector.broadcast %8 : vector<8x1xf32> to vector<8x256xf32>
    %10 = arith.mulf %5, %9 : vector<8x256xf32>
    %c0_2 = arith.constant 0 : index
    %c0_3 = arith.constant 0 : index
    %11 = vector.load %arg2[%c0_2, %c0_3] : memref<8x256xf32, #tpu.memory_space<vmem>>, vector<8x256xf32>
    tpu.vector_store %arg2[%c0_2, %c0_3], %10 {strides = array<i32>} : memref<8x256xf32, #tpu.memory_space<vmem>>, vector<8x256xf32>,
    return
  }
  func.func @transform_0(%arg0: i32) -> (i32, i32) {
    %c0_i32 = arith.constant 0 : i32
    %c0_i32_0 = arith.constant 0 : i32
    return %arg0, %c0_i32 : i32, i32
  }
  func.func @transform_1(%arg0: i32) -> (i32, i32) {
    %c0_i32 = arith.constant 0 : i32
    %c0_i32_0 = arith.constant 0 : i32
    return %arg0, %c0_i32 : i32, i32
  }
}

</mosaic_0001>

<llo_original>
// kernel: tpu_custom_call.1
$region0: #{tpu_custom_call.1}
  #allocation0 [shape = 'u32[]', space=smem, size = 0x4, offset = 0x4, fixed_abs, tag = 'smem constant byte address 0x4 - core index']
  #allocation1 [shape = 'u32[144,128]{1,0:T(1,128)}', space=vmem, size = 0x12000, scoped, tag = 'internal scratch']
  %s0 = inlined_call_operand.hbm [shape: f32[8,256], index: 0, kind: input, shape index: {}]
  %s1 = inlined_call_operand.hbm [shape: f32[8,256], index: 1, kind: output, shape index: {}]
  %s2 = sld [smem:[#allocation0]]
  $region18: #{tpu_custom_call.1} parent=0
    _
  %s4 = ssub.s32 1, %s2
  %s5 = scalar_select 0, %s4, %s2
  $region1: #{tpu_custom_call.1} parent=0
    #allocation2 [shape = 'u8[8192]{0}', space=vmem, size = 0x2000, scoped, tag = 'input window, operand 0, single buffered']
    #allocation3 [shape = 's32[1]{0}', space=sflag, size = 0x4, scoped, tag = 'scoped memory for tpu_custom_call.1']
    #allocation4 [shape = 's32[1]{0}', space=sflag, size = 0x4, scoped, tag = 'scoped memory for tpu_custom_call.1']
    #allocation5 [shape = 'u8[8192]{0}', space=vmem, size = 0x2000, scoped, tag = 'output window, operand 0, single buffered']
    %6 = vsyncpa [#allocation3], 0
    %7 = vsyncpa [#allocation4], 0
    // Predicated region
    $region2: #{tpu_custom_call.1} parent=1 // pred_check
      _
    $region3: #{tpu_custom_call.1} parent=1 // pred_check_branch
      %9 = sbr.rel (0) target = $region5
    $region4: #{tpu_custom_call.1} parent=1 // pred_region
      %s11 = ssub.s32 256, 256
      %12 = vsyncadd [#allocation3], %s11
      %s14 = sshll.u32 [#allocation2], 4
      %s15 = int_to_ptr.vmem [resolvable:$true] %s14
      %17 = dma.hbm_to_vmem [thread:$0]  %s0, 256, %s15, [#allocation3]
    $region5: #{tpu_custom_call.1} parent=1 // pred_fallthru
      _
    // Predicated region
    $region6: #{tpu_custom_call.1} parent=1 // pred_check
      _
    $region7: #{tpu_custom_call.1} parent=1 // pred_check_branch
      %19 = sbr.rel (0) target = $region9
    $region8: #{tpu_custom_call.1} parent=1 // pred_region
      %20 = dma.done [#allocation3], 256
    $region9: #{tpu_custom_call.1} parent=1 // pred_fallthru
      _
    %v21 = vld [vmem:[#allocation2] sm:$0xff]
    %v22 = vld [vmem:[#allocation2 + $0x8] sm:$0xff]
    %v23 = vmax.f32 %v21, %v22
    %24 = vmax.xlane.f32.xlu0 %v23
    %v25 = vpop.xlane.xlu0 %24
    %v26 = vsub.f32 %v21, %v25
    %v27 = vsub.f32 %v22, %v25
    %v28 = vmul.f32 %v26, 1.442695
    %v29 = vpow.pop %v28
    %v30 = vmul.f32 %v27, 1.442695
    %v31 = vpow.pop %v30
    %v32 = vadd.f32 %v29, %v31
    %33 = vadd.xlane.f32.xlu0 %v32
    %v34 = vpop.xlane.xlu0 %33
    %v35 = vrcp.pop %v34
    %v36 = vmul.f32 %v29, %v35
    %v37 = vmul.f32 %v31, %v35
    %38 = vst [vmem:[#allocation5] sm:$0xff] %v36
    %39 = vst [vmem:[#allocation5 + $0x8] sm:$0xff] %v37
    // Predicated region
    $region10: #{tpu_custom_call.1} parent=1 // pred_check
      _
    $region11: #{tpu_custom_call.1} parent=1 // pred_check_branch
      %41 = sbr.rel (0) target = $region13
    $region12: #{tpu_custom_call.1} parent=1 // pred_region
      %s43 = ssub.s32 256, 256
      %44 = vsyncadd [#allocation4], %s43
      %s46 = sshll.u32 [#allocation5], 4
      %s47 = int_to_ptr.vmem [resolvable:$true] %s46
      %49 = dma.vmem_to_hbm [thread:$0]  %s47, 256, %s1, [#allocation4]
    $region13: #{tpu_custom_call.1} parent=1 // pred_fallthru
      _
    // Predicated region
    $region14: #{tpu_custom_call.1} parent=1 // pred_check
      _
    $region15: #{tpu_custom_call.1} parent=1 // pred_check_branch
      %51 = sbr.rel (0) target = $region17
    $region16: #{tpu_custom_call.1} parent=1 // pred_region
      %52 = dma.done [#allocation4], 256
    $region17: #{tpu_custom_call.1} parent=1 // pred_fallthru
      _
    %53 = vsyncpa [#allocation3], 1
    %54 = vsyncpa [#allocation4], 1

</llo_original>
